<compile_context>
chip_gen: v7x
topology: tpu7x:2x2x1
jax: 0.10.0
libtpu: 0.0.40
codegen_flags: <defaults>
</compile_context>

<pallas_src>
import functools
from math import sqrt

import jax
import jax.numpy as jnp
from jax import lax
from jax.experimental import pallas as pl
from jax.experimental.pallas import tpu as pltpu


def _scorer_kernel(q_ref, k_ref, o_ref, *, inv_scale):
    # q_ref: (1, tt, M) VMEM tile, k_ref: (1, ts, N) VMEM tile (M == N),
    # o_ref: (1, tt, ts) VMEM tile.
    q = q_ref[0]                      # (tt, M)
    k = k_ref[0]                      # (ts, M)
    if inv_scale != 1.0:
        # Scale the (tt, M) query tile instead of the (tt, ts) result:
        # tt*M multiplies per tile instead of tt*ts (S >= M in practice).
        q = q * inv_scale
    # scores = q @ k.T : contract the feature dims.  Mosaic feeds k directly as
    # the transposed RHS of the MXU (no in-kernel XLU transpose).
    s = lax.dot_general(
        q, k,
        dimension_numbers=(((1,), (1,)), ((), ())),
        preferred_element_type=jnp.float32,
    )                                 # (tt, ts), f32 accumulation
    o_ref[0] = s.astype(o_ref.dtype)


def _pick_tile(dim: int, preferred: int, granule: int) -> int:
    """Largest tile <= preferred that evenly divides `dim` and is a multiple of
    `granule`; falls back to the full dim (always a legal block shape)."""
    if dim <= preferred:
        return dim
    t = (preferred // granule) * granule
    while t >= granule:
        if dim % t == 0:
            return t
        t -= granule
    return dim


def scorer(query: jax.Array, keys: jax.Array, scaled: bool = True,
           out_dtype=None, t_tile_pref: int = 256, s_tile_pref: int = 512) -> jax.Array:
    """Compute attention scores between query (bs, ..., T, M) and keys (bs, ..., S, N).

    Returns scores of shape (bs, ..., T, S), matching the PyTorch module contract.
    """
    assert query.ndim >= 2 and keys.ndim >= 2
    *lead_q, T, M = query.shape
    *lead_k, S, N = keys.shape
    assert tuple(lead_q) == tuple(lead_k), "leading (batch/head) dims must match"
    assert M == N, "dot-product scorer requires matching feature dims"

    if out_dtype is None:
        out_dtype = query.dtype        # f32 accumulate inside regardless
    hidden_size = max(M, N)
    inv_scale = (1.0 / sqrt(hidden_size)) if scaled else 1.0

    B = 1
    for d in lead_q:
        B *= d
    q3 = query.reshape(B, T, M)
    k3 = keys.reshape(B, S, N)

    # Tile T (sublane dim, multiple of 8) and S (output lane dim, multiple of 128).
    tt = _pick_tile(T, t_tile_pref, 8)
    ts = _pick_tile(S, s_tile_pref, 128)

    kernel = functools.partial(_scorer_kernel, inv_scale=inv_scale)

    # VMEM budget: double-buffered q/k/out tiles.  Sized so the largest default
    # tiling still leaves headroom against v7x's 64 MiB physical VMEM.
    in_bytes = jnp.dtype(query.dtype).itemsize
    out_bytes = jnp.dtype(out_dtype).itemsize
    tile_bytes = 2 * ((tt * M + ts * N) * in_bytes + tt * ts * out_bytes)
    vmem_limit = int(min(48 * 1024 * 1024, max(32 * 1024 * 1024, 2 * tile_bytes)))

    out = pl.pallas_call(
        kernel,
        out_shape=jax.ShapeDtypeStruct((B, T, S), out_dtype),
        grid_spec=pltpu.PrefetchScalarGridSpec(
            num_scalar_prefetch=0,
            # S-tile axis innermost: the q block index is constant across it,
            # so the q tile is not re-fetched while sweeping key tiles.
            grid=(B, T // tt, S // ts),
            in_specs=[
                pl.BlockSpec((1, tt, M), lambda b, i, j: (b, i, 0)),
                pl.BlockSpec((1, ts, N), lambda b, i, j: (b, j, 0)),
            ],
            out_specs=pl.BlockSpec((1, tt, ts), lambda b, i, j: (b, i, j)),
        ),
        compiler_params=pltpu.CompilerParams(
            # No reduction axis -> every grid axis is independent work.
            dimension_semantics=("parallel", "parallel", "parallel"),
            vmem_limit_bytes=vmem_limit,
        ),
    )(q3, k3)

    return out.reshape(*lead_q, T, S)


def _reference(query, keys, scaled=True):
    hidden = max(query.shape[-1], keys.shape[-1])
    denom = sqrt(hidden) if scaled else 1.0
    return jnp.einsum("...tm,...sm->...ts", query, keys) / denom


if __name__ == "__main__":
    key = jax.random.PRNGKey(0)
    k1, k2, k3, k4, k5, k6 = jax.random.split(key, 6)

    # Case 1: small 3-D shapes (batch, seq, hidden), scaled.
    B, T, S, H = 2, 8, 8, 32
    q = jax.random.normal(k1, (B, T, H), dtype=jnp.float32)
    kk = jax.random.normal(k2, (B, S, H), dtype=jnp.float32)
    out = scorer(q, kk, scaled=True)
    jax.block_until_ready(out)
    ref = _reference(q, kk, scaled=True)
    assert out.shape == (B, T, S)
    assert jnp.allclose(out, ref, atol=1e-4, rtol=1e-4), "case1 mismatch"

    # Case 2: multi-head 4-D shapes (batch, heads, seq, hidden), unscaled.
    Bh, Hh, T2, S2, D2 = 2, 4, 8, 8, 32
    q2 = jax.random.normal(k3, (Bh, Hh, T2, D2), dtype=jnp.float32)
    kk2 = jax.random.normal(k4, (Bh, Hh, S2, D2), dtype=jnp.float32)
    out2 = scorer(q2, kk2, scaled=False)
    jax.block_until_ready(out2)
    ref2 = _reference(q2, kk2, scaled=False)
    assert out2.shape == (Bh, Hh, T2, S2)
    assert jnp.allclose(out2, ref2, atol=1e-4, rtol=1e-4), "case2 mismatch"

    # Case 3: larger seq lens to exercise the tiled (B, T-tile, S-tile) path.
    B3, T3, S3, D3 = 2, 256, 256, 64
    q3 = jax.random.normal(k5, (B3, T3, D3), dtype=jnp.float32)
    kk3 = jax.random.normal(k6, (B3, S3, D3), dtype=jnp.float32)
    out3 = scorer(q3, kk3, scaled=True)
    jax.block_until_ready(out3)
    ref3 = _reference(q3, kk3, scaled=True)
    assert out3.shape == (B3, T3, S3)
    assert jnp.allclose(out3, ref3, atol=1e-4, rtol=1e-4), "case3 mismatch"

    print("KERNEL_OK")
</pallas_src>

<mosaic_0001>
module attributes {stable_mosaic.version = 11 : i64} {
  func.func @_scorer_kernel(%arg0: i32, %arg1: i32, %arg2: i32, %arg3: memref<1x8x32xf32, #tpu.memory_space<vmem>>, %arg4: memref<1x8x32xf32, #tpu.memory_space<vmem>>, %arg5: memref<1x8x8xf32, #tpu.memory_space<vmem>>) attributes {dimension_semantics = [#tpu.dimension_semantics<parallel>, #tpu.dimension_semantics<parallel>, #tpu.dimension_semantics<parallel>], iteration_bounds = array<i64: 2, 1, 1>, scalar_prefetch = 0 : i64, scratch_operands = 0 : i64, tpu.core_type = #tpu.core_type<tc>, window_params = [{transform_indices = @transform_0, window_bounds = array<i64: 1, 8, 32>}, {transform_indices = @transform_1, window_bounds = array<i64: 1, 8, 32>}, {transform_indices = @transform_2, window_bounds = array<i64: 1, 8, 8>}]} {
    %c0 = arith.constant 0 : index
    %c0_0 = arith.constant 0 : index
    %c0_1 = arith.constant 0 : index
    %0 = vector.load %arg3[%c0, %c0_0, %c0_1] : memref<1x8x32xf32, #tpu.memory_space<vmem>>, vector<1x8x32xf32>
    %1 = vector.shape_cast %0 : vector<1x8x32xf32> to vector<8x32xf32>
    %c0_2 = arith.constant 0 : index
    %c0_3 = arith.constant 0 : index
    %c0_4 = arith.constant 0 : index
    %2 = vector.load %arg4[%c0_2, %c0_3, %c0_4] : memref<1x8x32xf32, #tpu.memory_space<vmem>>, vector<1x8x32xf32>
    %3 = vector.shape_cast %2 : vector<1x8x32xf32> to vector<8x32xf32>
    %cst = arith.constant 0.176776692 : f32
    %4 = vector.broadcast %cst : f32 to vector<8x32xf32>
    %5 = arith.mulf %1, %4 : vector<8x32xf32>
    %cst_5 = arith.constant dense<0.000000e+00> : vector<8x8xf32>
    %6 = tpu.matmul %5, %3, %cst_5 {dimension_numbers = #tpu.dot_dimension_numbers<[1], [1], [0], [0], [0, 0, 1, 0], [], []>} : vector<8x32xf32>, vector<8x32xf32>, vector<8x8xf32> -> vector<8x8xf32>
    %c0_6 = arith.constant 0 : index
    %c0_7 = arith.constant 0 : index
    %c0_8 = arith.constant 0 : index
    %7 = vector.load %arg5[%c0_6, %c0_7, %c0_8] : memref<1x8x8xf32, #tpu.memory_space<vmem>>, vector<1x8x8xf32>
    %8 = vector.shape_cast %7 : vector<1x8x8xf32> to vector<8x8xf32>
    %9 = vector.shape_cast %6 : vector<8x8xf32> to vector<1x8x8xf32>
    tpu.vector_store %arg5[%c0_6, %c0_7, %c0_8], %9 {strides = array<i32>} : memref<1x8x8xf32, #tpu.memory_space<vmem>>, vector<1x8x8xf32>,
    return
  }
  func.func @transform_0(%arg0: i32, %arg1: i32, %arg2: i32) -> (i32, i32, i32) {
    %c0_i32 = arith.constant 0 : i32
    %c0_i32_0 = arith.constant 0 : i32
    return %arg0, %arg1, %c0_i32 : i32, i32, i32
  }
  func.func @transform_1(%arg0: i32, %arg1: i32, %arg2: i32) -> (i32, i32, i32) {
    %c0_i32 = arith.constant 0 : i32
    %c0_i32_0 = arith.constant 0 : i32
    return %arg0, %arg2, %c0_i32 : i32, i32, i32
  }
  func.func @transform_2(%arg0: i32, %arg1: i32, %arg2: i32) -> (i32, i32, i32) {
    %c0_i32 = arith.constant 0 : i32
    return %arg0, %arg1, %arg2 : i32, i32, i32
  }
}

</mosaic_0001>

<llo_original>
// kernel: tpu_custom_call.1
$region0: #{tpu_custom_call.1}
  #allocation0 [shape = 'u32[]', space=smem, size = 0x4, offset = 0x4, fixed_abs, tag = 'smem constant byte address 0x4 - core index']
  #allocation1 [shape = 'u32[144,128]{1,0:T(1,128)}', space=vmem, size = 0x12000, scoped, tag = 'internal scratch']
  %s0 = inlined_call_operand.hbm [shape: f32[2,8,32], index: 0, kind: input, shape index: {}]
  %s1 = inlined_call_operand.hbm [shape: f32[2,8,32], index: 1, kind: input, shape index: {}]
  %s2 = inlined_call_operand.hbm [shape: f32[2,8,8], index: 2, kind: output, shape index: {}]
  %s3 = sld [smem:[#allocation0]]
  $region49: #{tpu_custom_call.1} parent=0
    _
  %s5 = ssub.s32 1, %s3
  %s6 = scalar_select 0, %s5, %s3
  $region1: #{tpu_custom_call.1} parent=0
    #allocation2 [shape = 'u8[8192]{0}', space=vmem, size = 0x2000, scoped, tag = 'input window, operand 0']
    #allocation3 [shape = 's32[2]{0}', space=sflag, size = 0x8, scoped, tag = 'scoped memory for tpu_custom_call.1']
    #allocation4 [shape = 's32[2]{0}', space=sflag, size = 0x8, scoped, tag = 'scoped memory for tpu_custom_call.1']
    #allocation5 [shape = 'u8[8192]{0}', space=vmem, size = 0x2000, scoped, tag = 'input window, operand 1']
    #allocation6 [shape = 's32[2]{0}', space=sflag, size = 0x8, scoped, tag = 'scoped memory for tpu_custom_call.1']
    #allocation7 [shape = 'u8[8192]{0}', space=vmem, size = 0x2000, scoped, tag = 'output window, operand 0']
    %7 = vsyncpa [#allocation3], 0
    %s8 = scalar_lea.sflag [#allocation3], 1
    %9 = vsyncpa %s8, 0
    %10 = vsyncpa [#allocation6], 0
    %s11 = scalar_lea.sflag [#allocation6], 1
    %12 = vsyncpa %s11, 0
    %13 = vsyncpa [#allocation4], 0
    %s14 = scalar_lea.sflag [#allocation4], 1
    %15 = vsyncpa %s14, 0
    loop: start=0, step=1, limit=4
    $region2: #{tpu_custom_call.1} parent=1 // loop_pre_header
      _
    $region3: #{tpu_custom_call.1} parent=1 // loop_header
      %s17 = sphi 0, %s21
      %p18 = scmp.ge.s32.totalorder %s17, 4
      %s24 = sphi 0, %s43
      %s25 = sphi 0, %s39
      %s26 = sphi 0, %s35
      %s27 = sphi 0, %s24
      %s28 = sphi 0, %s25
      %s29 = sphi 0, %s26
      %s30 = sphi 0, %s27
      %s31 = sphi 0, %s28
      %s32 = sphi 0, %s29
      %s48 = sphi 0, %s50
      %s51 = sphi 0, %s48
      %s52 = sphi 0, %s51
      %s68 = sphi 0, %s52
      %s76 = sphi 0, %s78
      %s79 = sphi 0, %s76
      %s80 = sphi 0, %s79
      %s96 = sphi 0, %s80
      %s106 = sphi 0, %s108
      %s109 = sphi 0, %s106
      %s110 = sphi 0, %s109
      %s126 = sphi 0, %s110
    $region4: #{tpu_custom_call.1} parent=1 // loop_header_branch
      %20 = sbr.rel (%p18) target = $region8
    $region5: #{tpu_custom_call.1} parent=1 // loop_body
      %s22 = ssub.s32 %s17, 1
      %s23 = ssub.s32 %s17, 2
      %s33 = sadd.s32 1, %s26
      %p34 = scmp.ge.s32.totalorder %s33, 1
      %s35 = scalar_select %p34, 0, %s33
      %s36 = sadd.s32 1, %s25
      %s37 = scalar_select %p34, %s36, %s25
      %p38 = scmp.ge.s32.totalorder %s37, 1
      %s39 = scalar_select %p38, 0, %s37
      %s40 = sadd.s32 1, %s24
      %s41 = scalar_select %p38, %s40, %s24
      %p42 = scmp.ge.s32.totalorder %s41, 2
      %s43 = scalar_select %p42, 0, %s41
      %s44 = ssub.s32 %s24, %s43
      %s45 = ssub.s32 %s25, %s39
      %s46 = sor.u32 %s44, %s45
      %p47 = scmp.eq.s32.totalorder %s46, 0
      %s49 = sadd.s32 %s48, 1
      %s50 = scalar_select %p47, %s48, %s49
      %p53 = pneg %p47
      %p54 = scmp.eq.s32.totalorder %s17, 1
      %p55 = por %p53, %p54
      %p56 = scmp.ne.s32.totalorder %s48, %s51
      %p57 = scmp.eq.s32.totalorder %s17, 0
      %p58 = por %p56, %p57
      %p59 = scmp.ne.s32.totalorder %s48, %s51
      %p60 = scmp.eq.s32.totalorder %s22, 1
      %p61 = por %p59, %p60
      %p62 = scmp.ne.s32.totalorder %s51, %s52
      %p63 = scmp.eq.s32.totalorder %s22, 0
      %p64 = por %p62, %p63
      %p65 = scmp.ne.s32.totalorder %s51, %s52
      %p66 = scmp.eq.s32.totalorder %s23, 1
      %p67 = por %p65, %p66
      %p69 = scmp.ne.s32.totalorder %s52, %s68
      %p70 = scmp.eq.s32.totalorder %s23, 0
      %p71 = por %p69, %p70
      %s72 = ssub.s32 %s24, %s43
      %s73 = ssub.s32 %s26, %s35
      %s74 = sor.u32 %s72, %s73
      %p75 = scmp.eq.s32.totalorder %s74, 0
      %s77 = sadd.s32 %s76, 1
      %s78 = scalar_select %p75, %s76, %s77
      %p81 = pneg %p75
      %p82 = scmp.eq.s32.totalorder %s17, 1
      %p83 = por %p81, %p82
      %p84 = scmp.ne.s32.totalorder %s76, %s79
      %p85 = scmp.eq.s32.totalorder %s17, 0
      %p86 = por %p84, %p85
      %p87 = scmp.ne.s32.totalorder %s76, %s79
      %p88 = scmp.eq.s32.totalorder %s22, 1
      %p89 = por %p87, %p88
      %p90 = scmp.ne.s32.totalorder %s79, %s80
      %p91 = scmp.eq.s32.totalorder %s22, 0
      %p92 = por %p90, %p91
      %p93 = scmp.ne.s32.totalorder %s79, %s80
      %p94 = scmp.eq.s32.totalorder %s23, 1
      %p95 = por %p93, %p94
      %p97 = scmp.ne.s32.totalorder %s80, %s96
      %p98 = scmp.eq.s32.totalorder %s23, 0
      %p99 = por %p97, %p98
      %s100 = ssub.s32 %s24, %s43
      %s101 = ssub.s32 %s25, %s39
      %s102 = sor.u32 %s100, %s101
      %s103 = ssub.s32 %s26, %s35
      %s104 = sor.u32 %s102, %s103
      %p105 = scmp.eq.s32.totalorder %s104, 0
      %s107 = sadd.s32 %s106, 1
      %s108 = scalar_select %p105, %s106, %s107
      %p111 = pneg %p105
      %p112 = scmp.eq.s32.totalorder %s17, 1
      %p113 = por %p111, %p112
      %p114 = scmp.ne.s32.totalorder %s106, %s109
      %p115 = scmp.eq.s32.totalorder %s17, 0
      %p116 = por %p114, %p115
      %p117 = scmp.ne.s32.totalorder %s106, %s109
      %p118 = scmp.eq.s32.totalorder %s22, 1
      %p119 = por %p117, %p118
      %p120 = scmp.ne.s32.totalorder %s109, %s110
      %p121 = scmp.eq.s32.totalorder %s22, 0
      %p122 = por %p120, %p121
      %p123 = scmp.ne.s32.totalorder %s109, %s110
      %p124 = scmp.eq.s32.totalorder %s23, 1
      %p125 = por %p123, %p124
      %p127 = scmp.ne.s32.totalorder %s110, %s126
      %p128 = scmp.eq.s32.totalorder %s23, 0
      %p129 = por %p127, %p128
      %p130 = scmp.le.s32.totalorder 1, %s17
      %p131 = scmp.lt.s32.totalorder %s17, 3
      %p132 = pnand %p130, %p131
      %p133 = pneg %p132
      // Predicated region
      $region9: #{tpu_custom_call.1} parent=5 // pred_check
        _
      $region10: #{tpu_custom_call.1} parent=5 // pred_check_branch
        %135 = sbr.rel (%p132) target = $region12
      $region11: #{tpu_custom_call.1} parent=5 // pred_region
        %s136 = ssub.s32 %s17, 1
      $region12: #{tpu_custom_call.1} parent=5 // pred_fallthru
        _
      %p137 = scmp.lt.s32.totalorder %s17, 2
      // Predicated region
      $region13: #{tpu_custom_call.1} parent=5 // pred_check
        %p138 = pneg %p137
      $region14: #{tpu_custom_call.1} parent=5 // pred_check_branch
        %140 = sbr.rel (%p138) target = $region16
      $region15: #{tpu_custom_call.1} parent=5 // pred_region
        // Predicated region
        $region17: #{tpu_custom_call.1} parent=15 // pred_check
          %p141 = pneg %p58
        $region18: #{tpu_custom_call.1} parent=15 // pred_check_branch
          %143 = sbr.rel (%p141) target = $region20
        $region19: #{tpu_custom_call.1} parent=15 // pred_region
          %s144 = sand.u32 %s48, 1
          %s145 = scalar_lea.sflag [#allocation3], %s144
          %s146 = sand.u32 %s48, 1
          %s147 = smul.addr %s146, 8
          %s148 = scalar_lea.vmem [#allocation2], %s147
          %s150 = ssub.s32 128, 128
          %151 = vsyncadd %s145, %s150
          %s152 = sadd.s32 %s25, %s24
          %s153 = smul.addr %s152, 128
          %s154 = scalar_lea.hbm %s0, %s153
          %s156 = sshll.u32 %s148, 4
          %s157 = int_to_ptr.vmem [resolvable:$true] %s156
          %159 = dma.hbm_to_vmem [thread:$0]  %s154, 128, %s157, %s145
        $region20: #{tpu_custom_call.1} parent=15 // pred_fallthru
          _
        // Predicated region
        $region21: #{tpu_custom_call.1} parent=15 // pred_check
          %p160 = pneg %p86
        $region22: #{tpu_custom_call.1} parent=15 // pred_check_branch
          %162 = sbr.rel (%p160) target = $region24
        $region23: #{tpu_custom_call.1} parent=15 // pred_region
          %s163 = sand.u32 %s76, 1
          %s164 = scalar_lea.sflag [#allocation6], %s163
          %s165 = sand.u32 %s76, 1
          %s166 = smul.addr %s165, 8
          %s167 = scalar_lea.vmem [#allocation5], %s166
          %s169 = ssub.s32 128, 128
          %170 = vsyncadd %s164, %s169
          %s171 = sadd.s32 %s26, %s24
          %s172 = smul.addr %s171, 128
          %s173 = scalar_lea.hbm %s1, %s172
          %s175 = sshll.u32 %s167, 4
          %s176 = int_to_ptr.vmem [resolvable:$true] %s175
          %178 = dma.hbm_to_vmem [thread:$0]  %s173, 128, %s176, %s164
        $region24: #{tpu_custom_call.1} parent=15 // pred_fallthru
          _
      $region16: #{tpu_custom_call.1} parent=5 // pred_fallthru
        _
      %p179 = scmp.le.s32.totalorder 1, %s17
      %p180 = scmp.lt.s32.totalorder %s17, 3
      %p181 = pnand %p179, %p180
      %p182 = pneg %p181
      // Predicated region
      $region25: #{tpu_custom_call.1} parent=5 // pred_check
        _
      $region26: #{tpu_custom_call.1} parent=5 // pred_check_branch
        %184 = sbr.rel (%p181) target = $region28
      $region27: #{tpu_custom_call.1} parent=5 // pred_region
        %s185 = ssub.s32 %s17, 1
        %s186 = sand.u32 %s51, 1
        %s187 = scalar_lea.sflag [#allocation3], %s186
        %s188 = sand.u32 %s51, 1
        %s189 = smul.addr %s188, 8
        %s190 = scalar_lea.vmem [#allocation2], %s189
        // Predicated region
        $region29: #{tpu_custom_call.1} parent=27 // pred_check
          %p191 = pneg %p64
        $region30: #{tpu_custom_call.1} parent=27 // pred_check_branch
          %193 = sbr.rel (%p191) target = $region32
        $region31: #{tpu_custom_call.1} parent=27 // pred_region
          %194 = dma.done %s187, 128
        $region32: #{tpu_custom_call.1} parent=27 // pred_fallthru
          _
        %s195 = sand.u32 %s79, 1
        %s196 = scalar_lea.sflag [#allocation6], %s195
        %s197 = sand.u32 %s79, 1
        %s198 = smul.addr %s197, 8
        %s199 = scalar_lea.vmem [#allocation5], %s198
        // Predicated region
        $region33: #{tpu_custom_call.1} parent=27 // pred_check
          %p200 = pneg %p92
        $region34: #{tpu_custom_call.1} parent=27 // pred_check_branch
          %202 = sbr.rel (%p200) target = $region36
        $region35: #{tpu_custom_call.1} parent=27 // pred_region
          %203 = dma.done %s196, 128
        $region36: #{tpu_custom_call.1} parent=27 // pred_fallthru
          _
        %s204 = sand.u32 %s51, 1
        %s205 = scalar_lea.sflag [#allocation3], %s204
        %s206 = sand.u32 %s51, 1
        %s207 = smul.addr %s206, 8
        %s208 = scalar_lea.vmem [#allocation2], %s207
        %p209 = pneg %p64
        %p210 = pneg %p61
        %s211 = sand.u32 %s79, 1
        %s212 = scalar_lea.sflag [#allocation6], %s211
        %s213 = sand.u32 %s79, 1
        %s214 = smul.addr %s213, 8
        %s215 = scalar_lea.vmem [#allocation5], %s214
        %p216 = pneg %p92
        %p217 = pneg %p89
        %p218 = pneg %p122
        %p219 = pneg %p119
        %s220 = sand.u32 %s109, 1
        %s221 = scalar_lea.sflag [#allocation4], %s220
        %s222 = sand.u32 %s109, 1
        %s223 = smul.addr %s222, 8
        %s224 = scalar_lea.vmem [#allocation7], %s223
        %v225 = vld [vmem:[%s190] sm:$0xff]
        %v226 = vld [vmem:[%s199] sm:$0xff]
        %v227 = vmul.f32 %v225, 0.17677669
        %vm228 = vcmask 261120
        %v230 = vsel %vm228, %v227, 0
        %v233 = vsel %vm228, %v226, 0
        %235 = vmatprep.subr.mxu0 0.0
        %236 = vmatpush1.xpose.msra.mxu0 %v233
        %237 = vmatprep.subr.mxu0 0.0
        %238 = vmatpush1.xpose.msra.mxu0 0.0
        %239 = vmatprep.subr.mxu0 0.0
        %240 = vmatpush1.xpose.msra.mxu0 0.0
        %241 = vmatprep.subr.mxu0 0.0
        %242 = vmatpush1.xpose.msra.mxu0 0.0
        %243 = vmatprep.subr.mxu0 0.0
        %244 = vmatpush1.xpose.msra.mxu0 0.0
        %245 = vmatprep.subr.mxu0 0.0
        %246 = vmatpush1.xpose.msra.mxu0 0.0
        %247 = vmatprep.subr.mxu0 0.0
        %248 = vmatpush1.xpose.msra.mxu0 0.0
        %249 = vmatprep.subr.mxu0 0.0
        %250 = vmatpush1.xpose.msra.mxu0 0.0
        %251 = vmatprep.subr.mxu0 0.0
        %252 = vmatpush1.xpose.msra.mxu0 0.0
        %253 = vmatprep.subr.mxu0 0.0
        %254 = vmatpush1.xpose.msra.mxu0 0.0
        %255 = vmatprep.subr.mxu0 0.0
        %256 = vmatpush1.xpose.msra.mxu0 0.0
        %257 = vmatprep.subr.mxu0 0.0
        %258 = vmatpush1.xpose.msra.mxu0 0.0
        %259 = vmatprep.subr.mxu0 0.0
        %260 = vmatpush1.xpose.msra.mxu0 0.0
        %261 = vmatprep.subr.mxu0 0.0
        %262 = vmatpush1.xpose.msra.mxu0 0.0
        %263 = vmatprep.subr.mxu0 0.0
        %264 = vmatpush1.xpose.msra.mxu0 0.0
        %265 = vmatprep.subr.mxu0 0.0
        %266 = vmatpush1.xpose.msra.mxu0 0.0
        %267 = vmatprep.subr.mxu0 0.0
        %268 = vmatpush1.xpose.msra.mxu0 0.0
        %269 = vmatprep.subr.mxu0 0.0
        %270 = vmatpush1.xpose.msra.mxu0 0.0
        %271 = vmatprep.subr.mxu0 0.0
        %272 = vmatpush1.xpose.msra.mxu0 0.0
        %273 = vmatprep.subr.mxu0 0.0
        %274 = vmatpush1.xpose.msra.mxu0 0.0
        %275 = vmatprep.subr.mxu0 0.0
        %276 = vmatpush1.xpose.msra.mxu0 0.0
        %277 = vmatprep.subr.mxu0 0.0
        %278 = vmatpush1.xpose.msra.mxu0 0.0
        %279 = vmatprep.subr.mxu0 0.0
        %280 = vmatpush1.xpose.msra.mxu0 0.0
        %281 = vmatprep.subr.mxu0 0.0
        %282 = vmatpush1.xpose.msra.mxu0 0.0
        %283 = vmatprep.subr.mxu0 0.0
        %284 = vmatpush1.xpose.msra.mxu0 0.0
        %285 = vmatprep.subr.mxu0 0.0
        %286 = vmatpush1.xpose.msra.mxu0 0.0
        %287 = vmatprep.subr.mxu0 0.0
        %288 = vmatpush1.xpose.msra.mxu0 0.0
        %289 = vmatprep.subr.mxu0 0.0
        %290 = vmatpush1.xpose.msra.mxu0 0.0
        %291 = vmatprep.subr.mxu0 0.0
        %292 = vmatpush1.xpose.msra.mxu0 0.0
        %293 = vmatprep.subr.mxu0 0.0
        %294 = vmatpush1.xpose.msra.mxu0 0.0
        %295 = vmatprep.subr.mxu0 0.0
        %296 = vmatpush1.xpose.msra.mxu0 0.0
        %297 = vmatprep.subr.mxu0 0.0
        %298 = vmatpush1.xpose.msra.mxu0 0.0
        %299 = vmatprep.mubr.f32.mxu0 0.0
        %300 = vmatmul.mubr.f32.gmra.mrb[0].mxu0 %v230
        %v301 = vpop.f32.mrb[0].mxu0
        %v302 = vadd.f32 0.0, %v301
        %v303 = vpop.f32.mrb[0].mxu0
        %304 = vdwg.mxu0
        %vm305 = vcmask 64512
        %306 = vst.msk [vmem:[%s224] sm:$0xff] %vm305, %v302
        %s307 = sand.u32 %s109, 1
        %s308 = scalar_lea.sflag [#allocation4], %s307
        %s309 = sand.u32 %s109, 1
        %s310 = smul.addr %s309, 8
        %s311 = scalar_lea.vmem [#allocation7], %s310
        // Predicated region
        $region37: #{tpu_custom_call.1} parent=27 // pred_check
          %p312 = pneg %p119
        $region38: #{tpu_custom_call.1} parent=27 // pred_check_branch
          %314 = sbr.rel (%p312) target = $region40
        $region39: #{tpu_custom_call.1} parent=27 // pred_region
          %s316 = ssub.s32 128, 128
          %317 = vsyncadd %s308, %s316
          %s318 = sadd.s32 %s29, %s28
          %s319 = sadd.s32 %s318, %s27
          %s320 = smul.addr %s319, 128
          %s321 = scalar_lea.hbm %s2, %s320
          %s323 = sshll.u32 %s311, 4
          %s324 = int_to_ptr.vmem [resolvable:$true] %s323
          %326 = dma.vmem_to_hbm [thread:$0]  %s324, 128, %s321, %s308
        $region40: #{tpu_custom_call.1} parent=27 // pred_fallthru
          _
      $region28: #{tpu_custom_call.1} parent=5 // pred_fallthru
        _
      %p327 = scmp.le.s32.totalorder 2, %s17
      // Predicated region
      $region41: #{tpu_custom_call.1} parent=5 // pred_check
        %p328 = pneg %p327
      $region42: #{tpu_custom_call.1} parent=5 // pred_check_branch
        %330 = sbr.rel (%p328) target = $region44
      $region43: #{tpu_custom_call.1} parent=5 // pred_region
        %s331 = ssub.s32 %s17, 2
        // Predicated region
        $region45: #{tpu_custom_call.1} parent=43 // pred_check
          %p332 = pneg %p125
        $region46: #{tpu_custom_call.1} parent=43 // pred_check_branch
          %334 = sbr.rel (%p332) target = $region48
        $region47: #{tpu_custom_call.1} parent=43 // pred_region
          %s335 = sand.u32 %s110, 1
          %s336 = scalar_lea.sflag [#allocation4], %s335
          %s337 = sand.u32 %s110, 1
          %s338 = smul.addr %s337, 8
          %s339 = scalar_lea.vmem [#allocation7], %s338
          %340 = dma.done %s336, 128
        $region48: #{tpu_custom_call.1} parent=43 // pred_fallthru
          _
      $region44: #{tpu_custom_call.1} parent=5 // pred_fallthru
        _
    $region6: #{tpu_custom_call.1} parent=1 // loop_footer
      %s21 = sadd.s32 1, %s17
    $region7: #{tpu_custom_call.1} parent=1 // loop_footer_branch
      %16 = sbr.rel target = $region3
    $region8: #{tpu_custom_call.1} parent=1 // loop_exit
      _
    %341 = vsyncpa [#allocation3], 1
    %s342 = scalar_lea.sflag [#allocation3], 1
    %343 = vsyncpa %s342, 1
    %344 = vsyncpa [#allocation6], 1
    %s345 = scalar_lea.sflag [#allocation6], 1
    %346 = vsyncpa %s345, 1
    %347 = vsyncpa [#allocation4], 1
    %s348 = scalar_lea.sflag [#allocation4], 1
    %349 = vsyncpa %s348, 1

</llo_original>
